<compile_context>
chip_gen: v7x
topology: tpu7x:2x2x1
jax: 0.10.0
libtpu: 0.0.40
codegen_flags: <defaults>
</compile_context>

<pallas_src>
import jax
import jax.numpy as jnp
from jax.experimental import pallas as pl
from jax.experimental.pallas import tpu as pltpu


def _round_up(x, m):
    return ((x + m - 1) // m) * m


def _expand_norm_kernel(x_ref, w_ref, g_ref, gt_ref, gamma_ref, beta_ref, o_ref):
    # x_ref:     (C, tn)    channel-major slab of spatial positions (one image)
    # w_ref:     (2C, C)    expand weight, used as-is (no transpose needed)
    # g_ref:     (2C, 4)    one-hot group membership (broadcast matrix)
    # gt_ref:    (4, 2C)    its transpose (group-reduction matrix)
    # gamma_ref: (2C, 1)    LayerNorm scale, pre-tiled over the 4 groups
    # beta_ref:  (2C, 1)    LayerNorm shift, pre-tiled over the 4 groups
    # o_ref:     (2C, tn)   normalized output (single lane-dense store)
    c_half = g_ref.shape[0] // 4          # static
    inv_n = 1.0 / float(c_half)
    eps = 1e-5

    # Expand: (2C, C) @ (C, tn) -> (2C, tn), f32 accumulation on the MXU.
    y = jnp.dot(w_ref[...], x_ref[...].astype(w_ref.dtype),
                preferred_element_type=jnp.float32)

    g = g_ref[...]
    gt = gt_ref[...]

    # Per-group (per-column) mean via selector matmul (MXU), broadcast via G.
    mu = jnp.dot(gt, y, preferred_element_type=jnp.float32) * inv_n          # (4, tn)
    mu_full = jnp.dot(g, mu, preferred_element_type=jnp.float32)             # (2C, tn)
    d = y - mu_full

    # Per-group variance (two-pass, centered) the same way.
    var = jnp.dot(gt, d * d, preferred_element_type=jnp.float32) * inv_n     # (4, tn)
    inv = jax.lax.rsqrt(var + eps)                                           # (4, tn)
    inv_full = jnp.dot(g, inv, preferred_element_type=jnp.float32)           # (2C, tn)

    # Single full-width normalize + affine, single unmasked full-tile store.
    o_ref[...] = (d * inv_full * gamma_ref[...] + beta_ref[...]).astype(o_ref.dtype)


def swin_expand_forward(x, w_expand, gamma, beta, *, tn=1024, matmul_dtype=None):
    """x: (B, C, H, W) float32.  Returns (B, C//2, 2H, 2W) float32.

    matmul_dtype: optionally jnp.bfloat16 for the expand matmul (weight stored
    bf16, input tile cast in-register; f32 accumulation & f32 LN stats kept).
    """
    B, C, H, W = x.shape
    C2 = 2 * C
    c_half = C // 2
    HW = H * W

    # Channel-major view of the input: (B*C, H*W).  Free reshape, no HBM pass.
    x2 = x.reshape(B * C, HW)

    w = w_expand if matmul_dtype is None else w_expand.astype(matmul_dtype)

    # LayerNorm affine, pre-tiled across the 4 (p1, p2) groups -> (2C, 1) cols.
    gamma_col = jnp.tile(gamma.astype(jnp.float32), 4).reshape(C2, 1)
    beta_col = jnp.tile(beta.astype(jnp.float32), 4).reshape(C2, 1)

    # One-hot group selector (2C, 4) and its transpose for MXU group stats.
    grp = jnp.arange(C2, dtype=jnp.int32) // c_half
    g_sel = (grp[:, None] == jnp.arange(4, dtype=jnp.int32)[None, :]).astype(jnp.float32)
    g_sel_t = jnp.transpose(g_sel)                        # (4, 2C)

    # Lane tile along H*W: use the full extent when it fits (no pad); else a
    # 128-multiple tile with explicit zero padding (padded columns are
    # independent per-token work and are sliced away afterwards).
    tn = int(tn)
    if HW <= tn:
        tn_eff = HW
        HW_pad = HW
    else:
        tn_eff = max(128, (tn // 128) * 128)
        HW_pad = _round_up(HW, tn_eff)
        if HW_pad != HW:
            x2 = jnp.pad(x2, ((0, 0), (0, HW_pad - HW)))

    # VMEM budget estimate (double-buffered tiles + resident weight + f32 temps).
    x_isz = jnp.dtype(x2.dtype).itemsize
    w_isz = jnp.dtype(w.dtype).itemsize
    vmem_est = (2 * C * tn_eff * x_isz         # input tile (double buffered)
                + C2 * C * w_isz               # resident weight
                + 2 * C2 * tn_eff * 4          # output tile (double buffered)
                + 4 * C2 * tn_eff * 4)         # in-kernel f32 intermediates
    vmem_limit = int(min(max(vmem_est + (8 << 20), 32 << 20), 48 << 20))

    out = pl.pallas_call(
        _expand_norm_kernel,
        out_shape=jax.ShapeDtypeStruct((B * C2, HW_pad), jnp.float32),
        grid_spec=pltpu.PrefetchScalarGridSpec(
            num_scalar_prefetch=0,
            grid=(B, HW_pad // tn_eff),
            in_specs=[
                pl.BlockSpec((C, tn_eff), lambda b, j: (b, j)),
                pl.BlockSpec((C2, C), lambda b, j: (0, 0)),
                pl.BlockSpec((C2, 4), lambda b, j: (0, 0)),
                pl.BlockSpec((4, C2), lambda b, j: (0, 0)),
                pl.BlockSpec((C2, 1), lambda b, j: (0, 0)),
                pl.BlockSpec((C2, 1), lambda b, j: (0, 0)),
            ],
            out_specs=pl.BlockSpec((C2, tn_eff), lambda b, j: (b, j)),
        ),
        compiler_params=pltpu.CompilerParams(
            dimension_semantics=("parallel", "parallel"),
            vmem_limit_bytes=vmem_limit),
    )(x2, w, g_sel, g_sel_t, gamma_col, beta_col)

    out = out.reshape(B, C2, HW_pad)
    if HW_pad != HW:
        out = out[:, :, :HW]

    # Single fused rearrange: 'b (p1 p2 c) h w -> b c (h p1) (w p2)' as ONE
    # 6-D XLA transpose (patch interleave + channel regroup combined).
    y6 = out.reshape(B, 2, 2, c_half, H, W)
    out = jnp.transpose(y6, (0, 3, 4, 1, 5, 2)).reshape(B, c_half, 2 * H, 2 * W)
    return out


def _reference(x, w_expand, gamma, beta):
    B, C, H, W = x.shape
    c_half = C // 2
    t = jnp.transpose(x, (0, 2, 3, 1)).reshape(B, H * W, C)
    y = t @ w_expand.T                                   # (B, L, 2C)
    y = y.reshape(B, H, W, 2, 2, c_half)
    y = jnp.transpose(y, (0, 1, 3, 2, 4, 5)).reshape(B, 4 * H * W, c_half)
    mu = jnp.mean(y, axis=-1, keepdims=True)
    var = jnp.mean((y - mu) ** 2, axis=-1, keepdims=True)
    y = (y - mu) / jnp.sqrt(var + 1e-5) * gamma + beta
    y = y.reshape(B, 2 * H, 2 * W, c_half)
    return jnp.transpose(y, (0, 3, 1, 2))


if __name__ == "__main__":
    key = jax.random.PRNGKey(0)
    # dim=32 stand-in for dim=96 (same structure); H=W=12 -> H*W=144 so both
    # the full-extent path and the padded multi-tile path get exercised.
    B, C, H, W = 2, 32, 12, 12
    k1, k2, k3, k4 = jax.random.split(key, 4)

    x = jax.random.normal(k1, (B, C, H, W), dtype=jnp.float32)
    # nn.Linear(dim, 2*dim, bias=False): weight shape (2*dim, dim)
    w_expand = jax.random.normal(k2, (2 * C, C), dtype=jnp.float32) * (1.0 / jnp.sqrt(C))
    # nn.LayerNorm(dim // 2): affine params of shape (dim//2,)
    gamma = 1.0 + 0.1 * jax.random.normal(k3, (C // 2,), dtype=jnp.float32)
    beta = 0.1 * jax.random.normal(k4, (C // 2,), dtype=jnp.float32)

    ref = jax.block_until_ready(_reference(x, w_expand, gamma, beta))

    # Small lane tile: multi-step grid + padded (ragged) H*W path.
    out = jax.block_until_ready(swin_expand_forward(x, w_expand, gamma, beta, tn=128))
    assert out.shape == (B, C // 2, 2 * H, 2 * W), out.shape
    assert jnp.allclose(out, ref, atol=1e-4, rtol=1e-4), "mismatch vs reference (tn=128)"

    # Default tile: full-extent H*W, no padding.
    out2 = jax.block_until_ready(swin_expand_forward(x, w_expand, gamma, beta))
    assert jnp.allclose(out2, ref, atol=1e-4, rtol=1e-4), "mismatch vs reference (default tn)"

    # bf16 matmul knob (f32 accumulation + f32 LayerNorm stats), loose tolerance.
    out3 = jax.block_until_ready(
        swin_expand_forward(x, w_expand, gamma, beta, matmul_dtype=jnp.bfloat16))
    assert jnp.allclose(out3, ref, atol=1e-1, rtol=1e-1), "mismatch vs reference (bf16 matmul)"

    print("KERNEL_OK")
</pallas_src>

<mosaic_0001>
module attributes {stable_mosaic.version = 11 : i64} {
  func.func @_expand_norm_kernel(%arg0: i32, %arg1: i32, %arg2: memref<32x128xf32, #tpu.memory_space<vmem>>, %arg3: memref<64x32xf32, #tpu.memory_space<vmem>>, %arg4: memref<64x4xf32, #tpu.memory_space<vmem>>, %arg5: memref<4x64xf32, #tpu.memory_space<vmem>>, %arg6: memref<64x1xf32, #tpu.memory_space<vmem>>, %arg7: memref<64x1xf32, #tpu.memory_space<vmem>>, %arg8: memref<64x128xf32, #tpu.memory_space<vmem>>) attributes {dimension_semantics = [#tpu.dimension_semantics<parallel>, #tpu.dimension_semantics<parallel>], iteration_bounds = array<i64: 2, 2>, scalar_prefetch = 0 : i64, scratch_operands = 0 : i64, tpu.core_type = #tpu.core_type<tc>, window_params = [{transform_indices = @transform_0, window_bounds = array<i64: 32, 128>}, {pipeline_mode = #tpu.pipeline_mode<synchronous>, transform_indices = @transform_1, window_bounds = array<i64: 64, 32>}, {pipeline_mode = #tpu.pipeline_mode<synchronous>, transform_indices = @transform_2, window_bounds = array<i64: 64, 4>}, {pipeline_mode = #tpu.pipeline_mode<synchronous>, transform_indices = @transform_3, window_bounds = array<i64: 4, 64>}, {pipeline_mode = #tpu.pipeline_mode<synchronous>, transform_indices = @transform_4, window_bounds = array<i64: 64, 1>}, {pipeline_mode = #tpu.pipeline_mode<synchronous>, transform_indices = @transform_5, window_bounds = array<i64: 64, 1>}, {transform_indices = @transform_6, window_bounds = array<i64: 64, 128>}]} {
    %c0 = arith.constant 0 : index
    %c0_0 = arith.constant 0 : index
    %0 = vector.load %arg3[%c0, %c0_0] : memref<64x32xf32, #tpu.memory_space<vmem>>, vector<64x32xf32>
    %c0_1 = arith.constant 0 : index
    %c0_2 = arith.constant 0 : index
    %1 = vector.load %arg2[%c0_1, %c0_2] : memref<32x128xf32, #tpu.memory_space<vmem>>, vector<32x128xf32>
    %cst = arith.constant dense<0.000000e+00> : vector<64x128xf32>
    %2 = tpu.matmul %0, %1, %cst {dimension_numbers = #tpu.dot_dimension_numbers<[1], [0], [0], [1], [0, 0, 1, 1], [], []>} : vector<64x32xf32>, vector<32x128xf32>, vector<64x128xf32> -> vector<64x128xf32>
    %c0_3 = arith.constant 0 : index
    %c0_4 = arith.constant 0 : index
    %3 = vector.load %arg4[%c0_3, %c0_4] : memref<64x4xf32, #tpu.memory_space<vmem>>, vector<64x4xf32>
    %c0_5 = arith.constant 0 : index
    %c0_6 = arith.constant 0 : index
    %4 = vector.load %arg5[%c0_5, %c0_6] : memref<4x64xf32, #tpu.memory_space<vmem>>, vector<4x64xf32>
    %cst_7 = arith.constant dense<0.000000e+00> : vector<4x128xf32>
    %5 = tpu.matmul %4, %2, %cst_7 {dimension_numbers = #tpu.dot_dimension_numbers<[1], [0], [0], [1], [0, 0, 1, 1], [], []>} : vector<4x64xf32>, vector<64x128xf32>, vector<4x128xf32> -> vector<4x128xf32>
    %cst_8 = arith.constant 6.250000e-02 : f32
    %6 = vector.broadcast %cst_8 : f32 to vector<4x128xf32>
    %7 = arith.mulf %5, %6 : vector<4x128xf32>
    %cst_9 = arith.constant dense<0.000000e+00> : vector<64x128xf32>
    %8 = tpu.matmul %3, %7, %cst_9 {dimension_numbers = #tpu.dot_dimension_numbers<[1], [0], [0], [1], [0, 0, 1, 1], [], []>} : vector<64x4xf32>, vector<4x128xf32>, vector<64x128xf32> -> vector<64x128xf32>
    %9 = arith.subf %2, %8 : vector<64x128xf32>
    %10 = arith.mulf %9, %9 : vector<64x128xf32>
    %cst_10 = arith.constant dense<0.000000e+00> : vector<4x128xf32>
    %11 = tpu.matmul %4, %10, %cst_10 {dimension_numbers = #tpu.dot_dimension_numbers<[1], [0], [0], [1], [0, 0, 1, 1], [], []>} : vector<4x64xf32>, vector<64x128xf32>, vector<4x128xf32> -> vector<4x128xf32>
    %cst_11 = arith.constant 6.250000e-02 : f32
    %12 = vector.broadcast %cst_11 : f32 to vector<4x128xf32>
    %13 = arith.mulf %11, %12 : vector<4x128xf32>
    %cst_12 = arith.constant 9.99999974E-6 : f32
    %14 = vector.broadcast %cst_12 : f32 to vector<4x128xf32>
    %15 = arith.addf %13, %14 : vector<4x128xf32>
    %16 = math.rsqrt %15 : vector<4x128xf32>
    %cst_13 = arith.constant dense<0.000000e+00> : vector<64x128xf32>
    %17 = tpu.matmul %3, %16, %cst_13 {dimension_numbers = #tpu.dot_dimension_numbers<[1], [0], [0], [1], [0, 0, 1, 1], [], []>} : vector<64x4xf32>, vector<4x128xf32>, vector<64x128xf32> -> vector<64x128xf32>
    %18 = arith.mulf %9, %17 : vector<64x128xf32>
    %c0_14 = arith.constant 0 : index
    %c0_15 = arith.constant 0 : index
    %19 = vector.load %arg6[%c0_14, %c0_15] : memref<64x1xf32, #tpu.memory_space<vmem>>, vector<64x1xf32>
    %20 = vector.broadcast %19 : vector<64x1xf32> to vector<64x128xf32>
    %21 = arith.mulf %18, %20 : vector<64x128xf32>
    %c0_16 = arith.constant 0 : index
    %c0_17 = arith.constant 0 : index
    %22 = vector.load %arg7[%c0_16, %c0_17] : memref<64x1xf32, #tpu.memory_space<vmem>>, vector<64x1xf32>
    %23 = vector.broadcast %22 : vector<64x1xf32> to vector<64x128xf32>
    %24 = arith.addf %21, %23 : vector<64x128xf32>
    %c0_18 = arith.constant 0 : index
    %c0_19 = arith.constant 0 : index
    %25 = vector.load %arg8[%c0_18, %c0_19] : memref<64x128xf32, #tpu.memory_space<vmem>>, vector<64x128xf32>
    tpu.vector_store %arg8[%c0_18, %c0_19], %24 {strides = array<i32>} : memref<64x128xf32, #tpu.memory_space<vmem>>, vector<64x128xf32>,
    return
  }
  func.func @transform_0(%arg0: i32, %arg1: i32) -> (i32, i32) {
    %c0_i32 = arith.constant 0 : i32
    return %arg0, %arg1 : i32, i32
  }
  func.func @transform_1(%arg0: i32, %arg1: i32) -> (i32, i32) {
    %c0_i32 = arith.constant 0 : i32
    %c0_i32_0 = arith.constant 0 : i32
    %c0_i32_1 = arith.constant 0 : i32
    return %c0_i32, %c0_i32_0 : i32, i32
  }
  func.func @transform_2(%arg0: i32, %arg1: i32) -> (i32, i32) {
    %c0_i32 = arith.constant 0 : i32
    %c0_i32_0 = arith.constant 0 : i32
    %c0_i32_1 = arith.constant 0 : i32
    return %c0_i32, %c0_i32_0 : i32, i32
  }
  func.func @transform_3(%arg0: i32, %arg1: i32) -> (i32, i32) {
    %c0_i32 = arith.constant 0 : i32
    %c0_i32_0 = arith.constant 0 : i32
    %c0_i32_1 = arith.constant 0 : i32
    return %c0_i32, %c0_i32_0 : i32, i32
  }
  func.func @transform_4(%arg0: i32, %arg1: i32) -> (i32, i32) {
    %c0_i32 = arith.constant 0 : i32
    %c0_i32_0 = arith.constant 0 : i32
    %c0_i32_1 = arith.constant 0 : i32
    return %c0_i32, %c0_i32_0 : i32, i32
  }
  func.func @transform_5(%arg0: i32, %arg1: i32) -> (i32, i32) {
    %c0_i32 = arith.constant 0 : i32
    %c0_i32_0 = arith.constant 0 : i32
    %c0_i32_1 = arith.constant 0 : i32
    return %c0_i32, %c0_i32_0 : i32, i32
  }
  func.func @transform_6(%arg0: i32, %arg1: i32) -> (i32, i32) {
    %c0_i32 = arith.constant 0 : i32
    return %arg0, %arg1 : i32, i32
  }
}

</mosaic_0001>

<llo_original>
// kernel: tpu_custom_call.1
$region0: #{tpu_custom_call.1}
  #allocation0 [shape = 'u32[]', space=smem, size = 0x4, offset = 0x4, fixed_abs, tag = 'smem constant byte address 0x4 - core index']
  #allocation1 [shape = 'u32[144,128]{1,0:T(1,128)}', space=vmem, size = 0x12000, scoped, tag = 'internal scratch']
  %s0 = inlined_call_operand.vmem [shape: f32[64,256], index: 0, kind: input, shape index: {}]
  %s1 = inlined_call_operand.vmem [shape: f32[64,32], index: 1, kind: input, shape index: {}]
  %s2 = inlined_call_operand.vmem [shape: f32[64,4], index: 2, kind: input, shape index: {}]
  %s3 = inlined_call_operand.vmem [shape: f32[4,64], index: 3, kind: input, shape index: {}]
  %s4 = inlined_call_operand.vmem [shape: f32[64,1], index: 4, kind: input, shape index: {}]
  %s5 = inlined_call_operand.vmem [shape: f32[64,1], index: 5, kind: input, shape index: {}]
  %s6 = inlined_call_operand.hbm [shape: f32[128,256], index: 6, kind: output, shape index: {}]
  %s7 = sld [smem:[#allocation0]]
  $region95: #{tpu_custom_call.1} parent=0
    _
  %s9 = ssub.s32 1, %s7
  %s10 = scalar_select 0, %s9, %s7
  $region1: #{tpu_custom_call.1} parent=0
    #allocation2 [shape = 'u8[32768]{0}', space=vmem, size = 0x8000, scoped, tag = 'input window, operand 0']
    #allocation3 [shape = 'u8[65536]{0}', space=vmem, size = 0x10000, scoped, tag = 'output window, operand 0']
    #allocation4 [shape = 's32[2]{0}', space=sflag, size = 0x8, scoped, tag = 'scoped memory for tpu_custom_call.1']
    %11 = vsyncpa [#allocation4], 0
    %s12 = scalar_lea.sflag [#allocation4], 1
    %13 = vsyncpa %s12, 0
    loop: start=0, step=1, limit=6
    $region2: #{tpu_custom_call.1} parent=1 // loop_pre_header
      _
    $region3: #{tpu_custom_call.1} parent=1 // loop_header
      %s15 = sphi 0, %s19
      %p16 = scmp.ge.s32.totalorder %s15, 6
      %s22 = sphi 0, %s34
      %s23 = sphi 0, %s30
      %s24 = sphi 0, %s22
      %s25 = sphi 0, %s23
      %s26 = sphi 0, %s24
      %s27 = sphi 0, %s25
      %s39 = sphi 0, %s41
      %s42 = sphi 0, %s39
      %s43 = sphi 0, %s42
      %s59 = sphi 0, %s43
      %s63 = sphi 0, %s63
      %s65 = sphi 0, %s63
      %s66 = sphi 0, %s65
      %s80 = sphi 0, %s66
      %s84 = sphi 0, %s84
      %s86 = sphi 0, %s84
      %s87 = sphi 0, %s86
      %s101 = sphi 0, %s87
      %s105 = sphi 0, %s105
      %s107 = sphi 0, %s105
      %s108 = sphi 0, %s107
      %s122 = sphi 0, %s108
      %s126 = sphi 0, %s126
      %s128 = sphi 0, %s126
      %s129 = sphi 0, %s128
      %s143 = sphi 0, %s129
      %s147 = sphi 0, %s147
      %s149 = sphi 0, %s147
      %s150 = sphi 0, %s149
      %s164 = sphi 0, %s150
      %s172 = sphi 0, %s174
      %s175 = sphi 0, %s172
      %s176 = sphi 0, %s175
      %s192 = sphi 0, %s176
    $region4: #{tpu_custom_call.1} parent=1 // loop_header_branch
      %18 = sbr.rel (%p16) target = $region8
    $region5: #{tpu_custom_call.1} parent=1 // loop_body
      %s20 = ssub.s32 %s15, 1
      %s21 = ssub.s32 %s15, 2
      %s28 = sadd.s32 1, %s23
      %p29 = scmp.ge.s32.totalorder %s28, 2
      %s30 = scalar_select %p29, 0, %s28
      %s31 = sadd.s32 1, %s22
      %s32 = scalar_select %p29, %s31, %s22
      %p33 = scmp.ge.s32.totalorder %s32, 2
      %s34 = scalar_select %p33, 0, %s32
      %s35 = ssub.s32 %s22, %s34
      %s36 = ssub.s32 %s23, %s30
      %s37 = sor.u32 %s35, %s36
      %p38 = scmp.eq.s32.totalorder %s37, 0
      %s40 = sadd.s32 %s39, 1
      %s41 = scalar_select %p38, %s39, %s40
      %p44 = pneg %p38
      %p45 = scmp.eq.s32.totalorder %s15, 3
      %p46 = por %p44, %p45
      %p47 = scmp.ne.s32.totalorder %s39, %s42
      %p48 = scmp.eq.s32.totalorder %s15, 0
      %p49 = por %p47, %p48
      %p50 = scmp.ne.s32.totalorder %s39, %s42
      %p51 = scmp.eq.s32.totalorder %s20, 3
      %p52 = por %p50, %p51
      %p53 = scmp.ne.s32.totalorder %s42, %s43
      %p54 = scmp.eq.s32.totalorder %s20, 0
      %p55 = por %p53, %p54
      %p56 = scmp.ne.s32.totalorder %s42, %s43
      %p57 = scmp.eq.s32.totalorder %s21, 3
      %p58 = por %p56, %p57
      %p60 = scmp.ne.s32.totalorder %s43, %s59
      %p61 = scmp.eq.s32.totalorder %s21, 0
      %p62 = por %p60, %p61
      %s64 = sadd.s32 %s63, 1
      %p67 = scmp.eq.s32.totalorder %s15, 3
      %p68 = scmp.ne.s32.totalorder %s63, %s65
      %p69 = scmp.eq.s32.totalorder %s15, 0
      %p70 = por %p68, %p69
      %p71 = scmp.ne.s32.totalorder %s63, %s65
      %p72 = scmp.eq.s32.totalorder %s20, 3
      %p73 = por %p71, %p72
      %p74 = scmp.ne.s32.totalorder %s65, %s66
      %p75 = scmp.eq.s32.totalorder %s20, 0
      %p76 = por %p74, %p75
      %p77 = scmp.ne.s32.totalorder %s65, %s66
      %p78 = scmp.eq.s32.totalorder %s21, 3
      %p79 = por %p77, %p78
      %p81 = scmp.ne.s32.totalorder %s66, %s80
      %p82 = scmp.eq.s32.totalorder %s21, 0
      %p83 = por %p81, %p82
      %s85 = sadd.s32 %s84, 1
      %p88 = scmp.eq.s32.totalorder %s15, 3
      %p89 = scmp.ne.s32.totalorder %s84, %s86
      %p90 = scmp.eq.s32.totalorder %s15, 0
      %p91 = por %p89, %p90
      %p92 = scmp.ne.s32.totalorder %s84, %s86
      %p93 = scmp.eq.s32.totalorder %s20, 3
      %p94 = por %p92, %p93
      %p95 = scmp.ne.s32.totalorder %s86, %s87
      %p96 = scmp.eq.s32.totalorder %s20, 0
      %p97 = por %p95, %p96
      %p98 = scmp.ne.s32.totalorder %s86, %s87
      %p99 = scmp.eq.s32.totalorder %s21, 3
      %p100 = por %p98, %p99
      %p102 = scmp.ne.s32.totalorder %s87, %s101
      %p103 = scmp.eq.s32.totalorder %s21, 0
      %p104 = por %p102, %p103
      %s106 = sadd.s32 %s105, 1
      %p109 = scmp.eq.s32.totalorder %s15, 3
      %p110 = scmp.ne.s32.totalorder %s105, %s107
      %p111 = scmp.eq.s32.totalorder %s15, 0
      %p112 = por %p110, %p111
      %p113 = scmp.ne.s32.totalorder %s105, %s107
      %p114 = scmp.eq.s32.totalorder %s20, 3
      %p115 = por %p113, %p114
      %p116 = scmp.ne.s32.totalorder %s107, %s108
      %p117 = scmp.eq.s32.totalorder %s20, 0
      %p118 = por %p116, %p117
      %p119 = scmp.ne.s32.totalorder %s107, %s108
      %p120 = scmp.eq.s32.totalorder %s21, 3
      %p121 = por %p119, %p120
      %p123 = scmp.ne.s32.totalorder %s108, %s122
      %p124 = scmp.eq.s32.totalorder %s21, 0
      %p125 = por %p123, %p124
      %s127 = sadd.s32 %s126, 1
      %p130 = scmp.eq.s32.totalorder %s15, 3
      %p131 = scmp.ne.s32.totalorder %s126, %s128
      %p132 = scmp.eq.s32.totalorder %s15, 0
      %p133 = por %p131, %p132
      %p134 = scmp.ne.s32.totalorder %s126, %s128
      %p135 = scmp.eq.s32.totalorder %s20, 3
      %p136 = por %p134, %p135
      %p137 = scmp.ne.s32.totalorder %s128, %s129
      %p138 = scmp.eq.s32.totalorder %s20, 0
      %p139 = por %p137, %p138
      %p140 = scmp.ne.s32.totalorder %s128, %s129
      %p141 = scmp.eq.s32.totalorder %s21, 3
      %p142 = por %p140, %p141
      %p144 = scmp.ne.s32.totalorder %s129, %s143
      %p145 = scmp.eq.s32.totalorder %s21, 0
      %p146 = por %p144, %p145
      %s148 = sadd.s32 %s147, 1
      %p151 = scmp.eq.s32.totalorder %s15, 3
      %p152 = scmp.ne.s32.totalorder %s147, %s149
      %p153 = scmp.eq.s32.totalorder %s15, 0
      %p154 = por %p152, %p153
      %p155 = scmp.ne.s32.totalorder %s147, %s149
      %p156 = scmp.eq.s32.totalorder %s20, 3
      %p157 = por %p155, %p156
      %p158 = scmp.ne.s32.totalorder %s149, %s150
      %p159 = scmp.eq.s32.totalorder %s20, 0
      %p160 = por %p158, %p159
      %p161 = scmp.ne.s32.totalorder %s149, %s150
      %p162 = scmp.eq.s32.totalorder %s21, 3
      %p163 = por %p161, %p162
      %p165 = scmp.ne.s32.totalorder %s150, %s164
      %p166 = scmp.eq.s32.totalorder %s21, 0
      %p167 = por %p165, %p166
      %s168 = ssub.s32 %s22, %s34
      %s169 = ssub.s32 %s23, %s30
      %s170 = sor.u32 %s168, %s169
      %p171 = scmp.eq.s32.totalorder %s170, 0
      %s173 = sadd.s32 %s172, 1
      %s174 = scalar_select %p171, %s172, %s173
      %p177 = pneg %p171
      %p178 = scmp.eq.s32.totalorder %s15, 3
      %p179 = por %p177, %p178
      %p180 = scmp.ne.s32.totalorder %s172, %s175
      %p181 = scmp.eq.s32.totalorder %s15, 0
      %p182 = por %p180, %p181
      %p183 = scmp.ne.s32.totalorder %s172, %s175
      %p184 = scmp.eq.s32.totalorder %s20, 3
      %p185 = por %p183, %p184
      %p186 = scmp.ne.s32.totalorder %s175, %s176
      %p187 = scmp.eq.s32.totalorder %s20, 0
      %p188 = por %p186, %p187
      %p189 = scmp.ne.s32.totalorder %s175, %s176
      %p190 = scmp.eq.s32.totalorder %s21, 3
      %p191 = por %p189, %p190
      %p193 = scmp.ne.s32.totalorder %s176, %s192
      %p194 = scmp.eq.s32.totalorder %s21, 0
      %p195 = por %p193, %p194
      %p196 = scmp.le.s32.totalorder 1, %s15
      %p197 = scmp.lt.s32.totalorder %s15, 5
      %p198 = pnand %p196, %p197
      %p199 = pneg %p198
      // Predicated region
      $region9: #{tpu_custom_call.1} parent=5 // pred_check
        _
      $region10: #{tpu_custom_call.1} parent=5 // pred_check_branch
        %201 = sbr.rel (%p198) target = $region12
      $region11: #{tpu_custom_call.1} parent=5 // pred_region
        %s202 = ssub.s32 %s15, 1
        // Predicated region
        $region13: #{tpu_custom_call.1} parent=11 // pred_check
          %p203 = pneg %p76
        $region14: #{tpu_custom_call.1} parent=11 // pred_check_branch
          %205 = sbr.rel (%p203) target = $region16
        $region15: #{tpu_custom_call.1} parent=11 // pred_region
          _
        $region16: #{tpu_custom_call.1} parent=11 // pred_fallthru
          _
        // Predicated region
        $region17: #{tpu_custom_call.1} parent=11 // pred_check
          %p206 = pneg %p97
        $region18: #{tpu_custom_call.1} parent=11 // pred_check_branch
          %208 = sbr.rel (%p206) target = $region20
        $region19: #{tpu_custom_call.1} parent=11 // pred_region
          _
        $region20: #{tpu_custom_call.1} parent=11 // pred_fallthru
          _
        // Predicated region
        $region21: #{tpu_custom_call.1} parent=11 // pred_check
          %p209 = pneg %p118
        $region22: #{tpu_custom_call.1} parent=11 // pred_check_branch
          %211 = sbr.rel (%p209) target = $region24
        $region23: #{tpu_custom_call.1} parent=11 // pred_region
          _
        $region24: #{tpu_custom_call.1} parent=11 // pred_fallthru
          _
        // Predicated region
        $region25: #{tpu_custom_call.1} parent=11 // pred_check
          %p212 = pneg %p139
        $region26: #{tpu_custom_call.1} parent=11 // pred_check_branch
          %214 = sbr.rel (%p212) target = $region28
        $region27: #{tpu_custom_call.1} parent=11 // pred_region
          _
        $region28: #{tpu_custom_call.1} parent=11 // pred_fallthru
          _
        // Predicated region
        $region29: #{tpu_custom_call.1} parent=11 // pred_check
          %p215 = pneg %p160
        $region30: #{tpu_custom_call.1} parent=11 // pred_check_branch
          %217 = sbr.rel (%p215) target = $region32
        $region31: #{tpu_custom_call.1} parent=11 // pred_region
          _
        $region32: #{tpu_custom_call.1} parent=11 // pred_fallthru
          _
      $region12: #{tpu_custom_call.1} parent=5 // pred_fallthru
        _
      %p218 = scmp.lt.s32.totalorder %s15, 4
      // Predicated region
      $region33: #{tpu_custom_call.1} parent=5 // pred_check
        %p219 = pneg %p218
      $region34: #{tpu_custom_call.1} parent=5 // pred_check_branch
        %221 = sbr.rel (%p219) target = $region36
      $region35: #{tpu_custom_call.1} parent=5 // pred_region
        // Predicated region
        $region37: #{tpu_custom_call.1} parent=35 // pred_check
          %p222 = pneg %p49
        $region38: #{tpu_custom_call.1} parent=35 // pred_check_branch
          %224 = sbr.rel (%p222) target = $region40
        $region39: #{tpu_custom_call.1} parent=35 // pred_region
          %s225 = sand.u32 %s39, 1
          %s226 = sand.u32 %s39, 1
          %s227 = smul.addr %s226, 32
          %s228 = scalar_lea.vmem [#allocation2], %s227
          %s229 = smul.u32 4, %s22
          %s230 = smul.addr %s229, 2
          %s231 = sadd.s32 %s23, %s230
          %s232 = smul.addr %s231, 8
          %s233 = scalar_lea.vmem %s0, %s232
          // Predicated region
          $region41: #{tpu_custom_call.1} parent=39 // pred_check
            _
          $region42: #{tpu_custom_call.1} parent=39 // pred_check_branch
            %235 = sbr.rel (0) target = $region44
          $region43: #{tpu_custom_call.1} parent=39 // pred_region
            // Predicated region
            $region45: #{tpu_custom_call.1} parent=43 // pred_check
              _
            $region46: #{tpu_custom_call.1} parent=43 // pred_check_branch
              %237 = sbr.rel (0) target = $region48
            $region47: #{tpu_custom_call.1} parent=43 // pred_region
              // Predicated region
              $region60: #{tpu_custom_call.1} parent=47 // pred_check
                _
              $region61: #{tpu_custom_call.1} parent=47 // pred_check_branch
                %258 = sbr.rel (0) target = $region63
              $region62: #{tpu_custom_call.1} parent=47 // pred_region
                loop: start=0, step=1, limit=1
                $region64: #{tpu_custom_call.1} parent=62 // loop_pre_header
                  _
                $region65: #{tpu_custom_call.1} parent=62 // loop_header
                  %s260 = sphi 0, %s264
                  %p261 = scmp.ge.s32.totalorder %s260, 1
                  %s265 = sphi %s233, %s233
                  %s266 = sphi %s228, %s228
                $region66: #{tpu_custom_call.1} parent=62 // loop_header_branch
                  %263 = sbr.rel (%p261) target = $region70
                $region67: #{tpu_custom_call.1} parent=62 // loop_body
                  %v267 = vld [vmem:[%s265] sm:$0xff]
                  %268 = vst [vmem:[%s266] sm:$0xff] %v267
                  %v269 = vld [vmem:[%s265 + $0x10] sm:$0xff]
                  %270 = vst [vmem:[%s266 + $0x8] sm:$0xff] %v269
                  %v271 = vld [vmem:[%s265 + $0x20] sm:$0xff]
                  %272 = vst [vmem:[%s266 + $0x10] sm:$0xff] %v271
                  %v273 = vld [vmem:[%s265 + $0x30] sm:$0xff]
                  %274 = vst [vmem:[%s266 + $0x18] sm:$0xff] %v273
                $region68: #{tpu_custom_call.1} parent=62 // loop_footer
                  %s264 = sadd.s32 1, %s260
                $region69: #{tpu_custom_call.1} parent=62 // loop_footer_branch
                  %259 = sbr.rel target = $region65
                $region70: #{tpu_custom_call.1} parent=62 // loop_exit
                  _
              $region63: #{tpu_custom_call.1} parent=47 // pred_fallthru
                _
              // Predicated region
              $region71: #{tpu_custom_call.1} parent=47 // pred_check
                _
              $region72: #{tpu_custom_call.1} parent=47 // pred_check_branch
                %276 = sbr.rel target = $region74
              $region73: #{tpu_custom_call.1} parent=47 // pred_region
                _
              $region74: #{tpu_custom_call.1} parent=47 // pred_fallthru
                _
            $region48: #{tpu_custom_call.1} parent=43 // pred_fallthru
              _
            // Predicated region
            $region49: #{tpu_custom_call.1} parent=43 // pred_check
              _
            $region50: #{tpu_custom_call.1} parent=43 // pred_check_branch
              %239 = sbr.rel target = $region52
            $region51: #{tpu_custom_call.1} parent=43 // pred_region
              loop: start=0, step=1, limit=1
              $region53: #{tpu_custom_call.1} parent=51 // loop_pre_header
                _
              $region54: #{tpu_custom_call.1} parent=51 // loop_header
                %s242 = sphi 0, %s246
                %p243 = scmp.ge.s32.totalorder %s242, 1
                %s247 = sphi %s233, %s233
                %s248 = sphi %s228, %s228
              $region55: #{tpu_custom_call.1} parent=51 // loop_header_branch
                %245 = sbr.rel (%p243) target = $region59
              $region56: #{tpu_custom_call.1} parent=51 // loop_body
                %v249 = vld [vmem:[%s247] sm:$0xff]
                %250 = vst [vmem:[%s248] sm:$0xff] %v249
                %v251 = vld [vmem:[%s247 + $0x10] sm:$0xff]
                %252 = vst [vmem:[%s248 + $0x8] sm:$0xff] %v251
                %v253 = vld [vmem:[%s247 + $0x20] sm:$0xff]
                %254 = vst [vmem:[%s248 + $0x10] sm:$0xff] %v253
                %v255 = vld [vmem:[%s247 + $0x30] sm:$0xff]
                %256 = vst [vmem:[%s248 + $0x18] sm:$0xff] %v255
              $region57: #{tpu_custom_call.1} parent=51 // loop_footer
                %s246 = sadd.s32 1, %s242
              $region58: #{tpu_custom_call.1} parent=51 // loop_footer_branch
                %241 = sbr.rel target = $region54
              $region59: #{tpu_custom_call.1} parent=51 // loop_exit
                _
            $region52: #{tpu_custom_call.1} parent=43 // pred_fallthru
              _
          $region44: #{tpu_custom_call.1} parent=39 // pred_fallthru
            _
          %277 = vnop
        $region40: #{tpu_custom_call.1} parent=35 // pred_fallthru
          _
      $region36: #{tpu_custom_call.1} parent=5 // pred_fallthru
        _
      %p278 = scmp.le.s32.totalorder 1, %s15
      %p279 = scmp.lt.s32.totalorder %s15, 5
      %p280 = pnand %p278, %p279
      %p281 = pneg %p280
      // Predicated region
      $region75: #{tpu_custom_call.1} parent=5 // pred_check
        _
      $region76: #{tpu_custom_call.1} parent=5 // pred_check_branch
        %283 = sbr.rel (%p280) target = $region78
      $region77: #{tpu_custom_call.1} parent=5 // pred_region
        %s284 = ssub.s32 %s15, 1
        %s285 = sand.u32 %s42, 1
        %s286 = sand.u32 %s42, 1
        %s287 = smul.addr %s286, 32
        %s288 = scalar_lea.vmem [#allocation2], %s287
        // Predicated region
        $region79: #{tpu_custom_call.1} parent=77 // pred_check
          %p289 = pneg %p55
        $region80: #{tpu_custom_call.1} parent=77 // pred_check_branch
          %291 = sbr.rel (%p289) target = $region82
        $region81: #{tpu_custom_call.1} parent=77 // pred_region
          _
        $region82: #{tpu_custom_call.1} parent=77 // pred_fallthru
          _
        %s292 = sand.u32 %s42, 1
        %s293 = sand.u32 %s42, 1
        %s294 = smul.addr %s293, 32
        %s295 = scalar_lea.vmem [#allocation2], %s294
        %p296 = pneg %p55
        %p297 = pneg %p52
        %p298 = pneg %p76
        %p299 = pneg %p73
        %p300 = pneg %p97
        %p301 = pneg %p94
        %p302 = pneg %p118
        %p303 = pneg %p115
        %p304 = pneg %p139
        %p305 = pneg %p136
        %p306 = pneg %p160
        %p307 = pneg %p157
        %p308 = pneg %p188
        %p309 = pneg %p185
        %s310 = sand.u32 %s175, 1
        %s311 = scalar_lea.sflag [#allocation4], %s310
        %s312 = sand.u32 %s175, 1
        %s313 = smul.addr %s312, 64
        %s314 = scalar_lea.vmem [#allocation3], %s313
        %s315 = smul.u32 4, %s24
        %s316 = smul.u32 8, %s24
        %v317 = vld [vmem:[%s1] sm:$0xff]
        %v318 = vld [vmem:[%s1 + $0x8] sm:$0xff]
        %v319 = vld [vmem:[%s1 + $0x10] sm:$0xff]
        %v320 = vld [vmem:[%s1 + $0x18] sm:$0xff]
        %v321 = vld [vmem:[%s1 + $0x20] sm:$0xff]
        %v322 = vld [vmem:[%s1 + $0x28] sm:$0xff]
        %v323 = vld [vmem:[%s1 + $0x30] sm:$0xff]
        %v324 = vld [vmem:[%s1 + $0x38] sm:$0xff]
        %v325 = vld [vmem:[%s288] sm:$0xff]
        %v326 = vld [vmem:[%s288 + $0x8] sm:$0xff]
        %v327 = vld [vmem:[%s288 + $0x10] sm:$0xff]
        %v328 = vld [vmem:[%s288 + $0x18] sm:$0xff]
        %vm329 = vcmask 261120
        %v331 = vsel %vm329, %v317, 0
        %v334 = vsel %vm329, %v318, 0
        %v337 = vsel %vm329, %v319, 0
        %v340 = vsel %vm329, %v320, 0
        %v343 = vsel %vm329, %v321, 0
        %v346 = vsel %vm329, %v322, 0
        %v349 = vsel %vm329, %v323, 0
        %v352 = vsel %vm329, %v324, 0
        %354 = vmatprep.subr.mxu0 0.0
        %355 = vmatpush1.msra.mxu0 %v325
        %356 = vmatprep.subr.mxu0 0.0
        %357 = vmatpush1.msra.mxu0 %v326
        %358 = vmatprep.subr.mxu0 0.0
        %359 = vmatpush1.msra.mxu0 %v327
        %360 = vmatprep.subr.mxu0 0.0
        %361 = vmatpush1.msra.mxu0 %v328
        %362 = vmatprep.subr.mxu0 0.0
        %363 = vmatpush1.msra.mxu0 0.0
        %364 = vmatprep.subr.mxu0 0.0
        %365 = vmatpush1.msra.mxu0 0.0
        %366 = vmatprep.subr.mxu0 0.0
        %367 = vmatpush1.msra.mxu0 0.0
        %368 = vmatprep.subr.mxu0 0.0
        %369 = vmatpush1.msra.mxu0 0.0
        %370 = vmatprep.subr.mxu0 0.0
        %371 = vmatpush1.msra.mxu0 0.0
        %372 = vmatprep.subr.mxu0 0.0
        %373 = vmatpush1.msra.mxu0 0.0
        %374 = vmatprep.subr.mxu0 0.0
        %375 = vmatpush1.msra.mxu0 0.0
        %376 = vmatprep.subr.mxu0 0.0
        %377 = vmatpush1.msra.mxu0 0.0
        %378 = vmatprep.subr.mxu0 0.0
        %379 = vmatpush1.msra.mxu0 0.0
        %380 = vmatprep.subr.mxu0 0.0
        %381 = vmatpush1.msra.mxu0 0.0
        %382 = vmatprep.subr.mxu0 0.0
        %383 = vmatpush1.msra.mxu0 0.0
        %384 = vmatprep.subr.mxu0 0.0
        %385 = vmatpush1.msra.mxu0 0.0
        %386 = vmatprep.subr.mxu0 0.0
        %387 = vmatpush1.msra.mxu0 0.0
        %388 = vmatprep.subr.mxu0 0.0
        %389 = vmatpush1.msra.mxu0 0.0
        %390 = vmatprep.subr.mxu0 0.0
        %391 = vmatpush1.msra.mxu0 0.0
        %392 = vmatprep.subr.mxu0 0.0
        %393 = vmatpush1.msra.mxu0 0.0
        %394 = vmatprep.subr.mxu0 0.0
        %395 = vmatpush1.msra.mxu0 0.0
        %396 = vmatprep.subr.mxu0 0.0
        %397 = vmatpush1.msra.mxu0 0.0
        %398 = vmatprep.subr.mxu0 0.0
        %399 = vmatpush1.msra.mxu0 0.0
        %400 = vmatprep.subr.mxu0 0.0
        %401 = vmatpush1.msra.mxu0 0.0
        %402 = vmatprep.subr.mxu0 0.0
        %403 = vmatpush1.msra.mxu0 0.0
        %404 = vmatprep.subr.mxu0 0.0
        %405 = vmatpush1.msra.mxu0 0.0
        %406 = vmatprep.subr.mxu0 0.0
        %407 = vmatpush1.msra.mxu0 0.0
        %408 = vmatprep.subr.mxu0 0.0
        %409 = vmatpush1.msra.mxu0 0.0
        %410 = vmatprep.subr.mxu0 0.0
        %411 = vmatpush1.msra.mxu0 0.0
        %412 = vmatprep.subr.mxu0 0.0
        %413 = vmatpush1.msra.mxu0 0.0
        %414 = vmatprep.subr.mxu0 0.0
        %415 = vmatpush1.msra.mxu0 0.0
        %416 = vmatprep.subr.mxu0 0.0
        %417 = vmatpush1.msra.mxu0 0.0
        %418 = vmatprep.mubr.f32.mxu0 0.0
        %419 = vmatmul.mubr.f32.gmra.mrb[0].mxu0 %v331
        %v420 = vpop.f32.mrb[0].mxu0
        %v421 = vadd.f32 0.0, %v420
        %v422 = vpop.f32.mrb[0].mxu0
        %423 = vmatprep.mubr.f32.mxu0 0.0
        %424 = vmatmul.mubr.f32.gmra.mrb[0].mxu0 %v334
        %v425 = vpop.f32.mrb[0].mxu0
        %v426 = vadd.f32 0.0, %v425
        %v427 = vpop.f32.mrb[0].mxu0
        %428 = vmatprep.mubr.f32.mxu0 0.0
        %429 = vmatmul.mubr.f32.gmra.mrb[0].mxu0 %v337
        %v430 = vpop.f32.mrb[0].mxu0
        %v431 = vadd.f32 0.0, %v430
        %v432 = vpop.f32.mrb[0].mxu0
        %433 = vmatprep.mubr.f32.mxu0 0.0
        %434 = vmatmul.mubr.f32.gmra.mrb[0].mxu0 %v340
        %v435 = vpop.f32.mrb[0].mxu0
        %v436 = vadd.f32 0.0, %v435
        %v437 = vpop.f32.mrb[0].mxu0
        %438 = vmatprep.mubr.f32.mxu0 0.0
        %439 = vmatmul.mubr.f32.gmra.mrb[0].mxu0 %v343
        %v440 = vpop.f32.mrb[0].mxu0
        %v441 = vadd.f32 0.0, %v440
        %v442 = vpop.f32.mrb[0].mxu0
        %443 = vmatprep.mubr.f32.mxu0 0.0
        %444 = vmatmul.mubr.f32.gmra.mrb[0].mxu0 %v346
        %v445 = vpop.f32.mrb[0].mxu0
        %v446 = vadd.f32 0.0, %v445
        %v447 = vpop.f32.mrb[0].mxu0
        %448 = vmatprep.mubr.f32.mxu0 0.0
        %449 = vmatmul.mubr.f32.gmra.mrb[0].mxu0 %v349
        %v450 = vpop.f32.mrb[0].mxu0
        %v451 = vadd.f32 0.0, %v450
        %v452 = vpop.f32.mrb[0].mxu0
        %453 = vmatprep.mubr.f32.mxu0 0.0
        %454 = vmatmul.mubr.f32.gmra.mrb[0].mxu0 %v352
        %v455 = vpop.f32.mrb[0].mxu0
        %v456 = vadd.f32 0.0, %v455
        %v457 = vpop.f32.mrb[0].mxu0
        %458 = vdwg.mxu0
        %v459 = vld [vmem:[%s2] sm:$0xff]
        %v460 = vld [vmem:[%s2 + $0x8] sm:$0xff]
        %v461 = vld [vmem:[%s2 + $0x10] sm:$0xff]
        %v462 = vld [vmem:[%s2 + $0x18] sm:$0xff]
        %v463 = vld [vmem:[%s2 + $0x20] sm:$0xff]
        %v464 = vld [vmem:[%s2 + $0x28] sm:$0xff]
        %v465 = vld [vmem:[%s2 + $0x30] sm:$0xff]
        %v466 = vld [vmem:[%s2 + $0x38] sm:$0xff]
        %v467 = vld [vmem:[%s3] sm:$0xf]
        %vm468 = vcmask 523264
        %v470 = vsel %vm468, %v467, 0
        %472 = vmatprep.subr.mxu0 0.0
        %473 = vmatpush1.msra.mxu0 %v421
        %474 = vmatprep.subr.mxu0 0.0
        %475 = vmatpush1.msra.mxu0 %v426
        %476 = vmatprep.subr.mxu0 0.0
        %477 = vmatpush1.msra.mxu0 %v431
        %478 = vmatprep.subr.mxu0 0.0
        %479 = vmatpush1.msra.mxu0 %v436
        %480 = vmatprep.subr.mxu0 0.0
        %481 = vmatpush1.msra.mxu0 %v441
        %482 = vmatprep.subr.mxu0 0.0
        %483 = vmatpush1.msra.mxu0 %v446
        %484 = vmatprep.subr.mxu0 0.0
        %485 = vmatpush1.msra.mxu0 %v451
        %486 = vmatprep.subr.mxu0 0.0
        %487 = vmatpush1.msra.mxu0 %v456
        %488 = vmatprep.subr.mxu0 0.0
        %489 = vmatpush1.msra.mxu0 0.0
        %490 = vmatprep.subr.mxu0 0.0
        %491 = vmatpush1.msra.mxu0 0.0
        %492 = vmatprep.subr.mxu0 0.0
        %493 = vmatpush1.msra.mxu0 0.0
        %494 = vmatprep.subr.mxu0 0.0
        %495 = vmatpush1.msra.mxu0 0.0
        %496 = vmatprep.subr.mxu0 0.0
        %497 = vmatpush1.msra.mxu0 0.0
        %498 = vmatprep.subr.mxu0 0.0
        %499 = vmatpush1.msra.mxu0 0.0
        %500 = vmatprep.subr.mxu0 0.0
        %501 = vmatpush1.msra.mxu0 0.0
        %502 = vmatprep.subr.mxu0 0.0
        %503 = vmatpush1.msra.mxu0 0.0
        %504 = vmatprep.subr.mxu0 0.0
        %505 = vmatpush1.msra.mxu0 0.0
        %506 = vmatprep.subr.mxu0 0.0
        %507 = vmatpush1.msra.mxu0 0.0
        %508 = vmatprep.subr.mxu0 0.0
        %509 = vmatpush1.msra.mxu0 0.0
        %510 = vmatprep.subr.mxu0 0.0
        %511 = vmatpush1.msra.mxu0 0.0
        %512 = vmatprep.subr.mxu0 0.0
        %513 = vmatpush1.msra.mxu0 0.0
        %514 = vmatprep.subr.mxu0 0.0
        %515 = vmatpush1.msra.mxu0 0.0
        %516 = vmatprep.subr.mxu0 0.0
        %517 = vmatpush1.msra.mxu0 0.0
        %518 = vmatprep.subr.mxu0 0.0
        %519 = vmatpush1.msra.mxu0 0.0
        %520 = vmatprep.subr.mxu0 0.0
        %521 = vmatpush1.msra.mxu0 0.0
        %522 = vmatprep.subr.mxu0 0.0
        %523 = vmatpush1.msra.mxu0 0.0
        %524 = vmatprep.subr.mxu0 0.0
        %525 = vmatpush1.msra.mxu0 0.0
        %526 = vmatprep.subr.mxu0 0.0
        %527 = vmatpush1.msra.mxu0 0.0
        %528 = vmatprep.subr.mxu0 0.0
        %529 = vmatpush1.msra.mxu0 0.0
        %530 = vmatprep.subr.mxu0 0.0
        %531 = vmatpush1.msra.mxu0 0.0
        %532 = vmatprep.subr.mxu0 0.0
        %533 = vmatpush1.msra.mxu0 0.0
        %534 = vmatprep.subr.mxu0 0.0
        %535 = vmatpush1.msra.mxu0 0.0
        %536 = vmatprep.mubr.f32.mxu0 0.0
        %537 = vmatmul.mubr.f32.gmra.mrb[0].mxu0 %v470
        %v538 = vpop.f32.mrb[0].mxu0
        %v539 = vadd.f32 0.0, %v538
        %v540 = vpop.f32.mrb[0].mxu0
        %541 = vdwg.mxu0
        %v542 = vmul.f32 %v539, 0.0625
        %vm543 = vcmask 31744
        %v545 = vsel %vm543, %v459, 0
        %v548 = vsel %vm543, %v460, 0
        %v551 = vsel %vm543, %v461, 0
        %v554 = vsel %vm543, %v462, 0
        %v557 = vsel %vm543, %v463, 0
        %v560 = vsel %vm543, %v464, 0
        %v563 = vsel %vm543, %v465, 0
        %v566 = vsel %vm543, %v466, 0
        %vm568 = vcmask 1043456
        %v570 = vsel %vm568, %v542, 0
        %572 = vmatprep.subr.mxu0 0.0
        %573 = vmatpush1.msra.mxu0 %v570
        %574 = vmatprep.subr.mxu0 0.0
        %575 = vmatpush1.msra.mxu0 0.0
        %576 = vmatprep.subr.mxu0 0.0
        %577 = vmatpush1.msra.mxu0 0.0
        %578 = vmatprep.subr.mxu0 0.0
        %579 = vmatpush1.msra.mxu0 0.0
        %580 = vmatprep.subr.mxu0 0.0
        %581 = vmatpush1.msra.mxu0 0.0
        %582 = vmatprep.subr.mxu0 0.0
        %583 = vmatpush1.msra.mxu0 0.0
        %584 = vmatprep.subr.mxu0 0.0
        %585 = vmatpush1.msra.mxu0 0.0
        %586 = vmatprep.subr.mxu0 0.0
        %587 = vmatpush1.msra.mxu0 0.0
        %588 = vmatprep.subr.mxu0 0.0
        %589 = vmatpush1.msra.mxu0 0.0
        %590 = vmatprep.subr.mxu0 0.0
        %591 = vmatpush1.msra.mxu0 0.0
        %592 = vmatprep.subr.mxu0 0.0
        %593 = vmatpush1.msra.mxu0 0.0
        %594 = vmatprep.subr.mxu0 0.0
        %595 = vmatpush1.msra.mxu0 0.0
        %596 = vmatprep.subr.mxu0 0.0
        %597 = vmatpush1.msra.mxu0 0.0
        %598 = vmatprep.subr.mxu0 0.0
        %599 = vmatpush1.msra.mxu0 0.0
        %600 = vmatprep.subr.mxu0 0.0
        %601 = vmatpush1.msra.mxu0 0.0
        %602 = vmatprep.subr.mxu0 0.0
        %603 = vmatpush1.msra.mxu0 0.0
        %604 = vmatprep.subr.mxu0 0.0
        %605 = vmatpush1.msra.mxu0 0.0
        %606 = vmatprep.subr.mxu0 0.0
        %607 = vmatpush1.msra.mxu0 0.0
        %608 = vmatprep.subr.mxu0 0.0
        %609 = vmatpush1.msra.mxu0 0.0
        %610 = vmatprep.subr.mxu0 0.0
        %611 = vmatpush1.msra.mxu0 0.0
        %612 = vmatprep.subr.mxu0 0.0
        %613 = vmatpush1.msra.mxu0 0.0
        %614 = vmatprep.subr.mxu0 0.0
        %615 = vmatpush1.msra.mxu0 0.0
        %616 = vmatprep.subr.mxu0 0.0
        %617 = vmatpush1.msra.mxu0 0.0
        %618 = vmatprep.subr.mxu0 0.0
        %619 = vmatpush1.msra.mxu0 0.0
        %620 = vmatprep.subr.mxu0 0.0
        %621 = vmatpush1.msra.mxu0 0.0
        %622 = vmatprep.subr.mxu0 0.0
        %623 = vmatpush1.msra.mxu0 0.0
        %624 = vmatprep.subr.mxu0 0.0
        %625 = vmatpush1.msra.mxu0 0.0
        %626 = vmatprep.subr.mxu0 0.0
        %627 = vmatpush1.msra.mxu0 0.0
        %628 = vmatprep.subr.mxu0 0.0
        %629 = vmatpush1.msra.mxu0 0.0
        %630 = vmatprep.subr.mxu0 0.0
        %631 = vmatpush1.msra.mxu0 0.0
        %632 = vmatprep.subr.mxu0 0.0
        %633 = vmatpush1.msra.mxu0 0.0
        %634 = vmatprep.subr.mxu0 0.0
        %635 = vmatpush1.msra.mxu0 0.0
        %636 = vmatprep.mubr.f32.mxu0 0.0
        %637 = vmatmul.mubr.f32.gmra.mrb[0].mxu0 %v545
        %v638 = vpop.f32.mrb[0].mxu0
        %v639 = vadd.f32 0.0, %v638
        %v640 = vpop.f32.mrb[0].mxu0
        %641 = vmatprep.mubr.f32.mxu0 0.0
        %642 = vmatmul.mubr.f32.gmra.mrb[0].mxu0 %v548
        %v643 = vpop.f32.mrb[0].mxu0
        %v644 = vadd.f32 0.0, %v643
        %v645 = vpop.f32.mrb[0].mxu0
        %646 = vmatprep.mubr.f32.mxu0 0.0
        %647 = vmatmul.mubr.f32.gmra.mrb[0].mxu0 %v551
        %v648 = vpop.f32.mrb[0].mxu0
        %v649 = vadd.f32 0.0, %v648
        %v650 = vpop.f32.mrb[0].mxu0
        %651 = vmatprep.mubr.f32.mxu0 0.0
        %652 = vmatmul.mubr.f32.gmra.mrb[0].mxu0 %v554
        %v653 = vpop.f32.mrb[0].mxu0
        %v654 = vadd.f32 0.0, %v653
        %v655 = vpop.f32.mrb[0].mxu0
        %656 = vmatprep.mubr.f32.mxu0 0.0
        %657 = vmatmul.mubr.f32.gmra.mrb[0].mxu0 %v557
        %v658 = vpop.f32.mrb[0].mxu0
        %v659 = vadd.f32 0.0, %v658
        %v660 = vpop.f32.mrb[0].mxu0
        %661 = vmatprep.mubr.f32.mxu0 0.0
        %662 = vmatmul.mubr.f32.gmra.mrb[0].mxu0 %v560
        %v663 = vpop.f32.mrb[0].mxu0
        %v664 = vadd.f32 0.0, %v663
        %v665 = vpop.f32.mrb[0].mxu0
        %666 = vmatprep.mubr.f32.mxu0 0.0
        %667 = vmatmul.mubr.f32.gmra.mrb[0].mxu0 %v563
        %v668 = vpop.f32.mrb[0].mxu0
        %v669 = vadd.f32 0.0, %v668
        %v670 = vpop.f32.mrb[0].mxu0
        %671 = vmatprep.mubr.f32.mxu0 0.0
        %672 = vmatmul.mubr.f32.gmra.mrb[0].mxu0 %v566
        %v673 = vpop.f32.mrb[0].mxu0
        %v674 = vadd.f32 0.0, %v673
        %v675 = vpop.f32.mrb[0].mxu0
        %676 = vdwg.mxu0
        %v677 = vsub.f32 %v421, %v639
        %v678 = vsub.f32 %v426, %v644
        %v679 = vsub.f32 %v431, %v649
        %v680 = vsub.f32 %v436, %v654
        %v681 = vsub.f32 %v441, %v659
        %v682 = vsub.f32 %v446, %v664
        %v683 = vsub.f32 %v451, %v669
        %v684 = vsub.f32 %v456, %v674
        %v685 = vmul.f32 %v677, %v677
        %v686 = vmul.f32 %v678, %v678
        %v687 = vmul.f32 %v679, %v679
        %v688 = vmul.f32 %v680, %v680
        %v689 = vmul.f32 %v681, %v681
        %v690 = vmul.f32 %v682, %v682
        %v691 = vmul.f32 %v683, %v683
        %v692 = vmul.f32 %v684, %v684
        %693 = vmatprep.subr.mxu0 0.0
        %694 = vmatpush1.msra.mxu0 %v685
        %695 = vmatprep.subr.mxu0 0.0
        %696 = vmatpush1.msra.mxu0 %v686
        %697 = vmatprep.subr.mxu0 0.0
        %698 = vmatpush1.msra.mxu0 %v687
        %699 = vmatprep.subr.mxu0 0.0
        %700 = vmatpush1.msra.mxu0 %v688
        %701 = vmatprep.subr.mxu0 0.0
        %702 = vmatpush1.msra.mxu0 %v689
        %703 = vmatprep.subr.mxu0 0.0
        %704 = vmatpush1.msra.mxu0 %v690
        %705 = vmatprep.subr.mxu0 0.0
        %706 = vmatpush1.msra.mxu0 %v691
        %707 = vmatprep.subr.mxu0 0.0
        %708 = vmatpush1.msra.mxu0 %v692
        %709 = vmatprep.subr.mxu0 0.0
        %710 = vmatpush1.msra.mxu0 0.0
        %711 = vmatprep.subr.mxu0 0.0
        %712 = vmatpush1.msra.mxu0 0.0
        %713 = vmatprep.subr.mxu0 0.0
        %714 = vmatpush1.msra.mxu0 0.0
        %715 = vmatprep.subr.mxu0 0.0
        %716 = vmatpush1.msra.mxu0 0.0
        %717 = vmatprep.subr.mxu0 0.0
        %718 = vmatpush1.msra.mxu0 0.0
        %719 = vmatprep.subr.mxu0 0.0
        %720 = vmatpush1.msra.mxu0 0.0
        %721 = vmatprep.subr.mxu0 0.0
        %722 = vmatpush1.msra.mxu0 0.0
        %723 = vmatprep.subr.mxu0 0.0
        %724 = vmatpush1.msra.mxu0 0.0
        %725 = vmatprep.subr.mxu0 0.0
        %726 = vmatpush1.msra.mxu0 0.0
        %727 = vmatprep.subr.mxu0 0.0
        %728 = vmatpush1.msra.mxu0 0.0
        %729 = vmatprep.subr.mxu0 0.0
        %730 = vmatpush1.msra.mxu0 0.0
        %731 = vmatprep.subr.mxu0 0.0
        %732 = vmatpush1.msra.mxu0 0.0
        %733 = vmatprep.subr.mxu0 0.0
        %734 = vmatpush1.msra.mxu0 0.0
        %735 = vmatprep.subr.mxu0 0.0
        %736 = vmatpush1.msra.mxu0 0.0
        %737 = vmatprep.subr.mxu0 0.0
        %738 = vmatpush1.msra.mxu0 0.0
        %739 = vmatprep.subr.mxu0 0.0
        %740 = vmatpush1.msra.mxu0 0.0
        %741 = vmatprep.subr.mxu0 0.0
        %742 = vmatpush1.msra.mxu0 0.0
        %743 = vmatprep.subr.mxu0 0.0
        %744 = vmatpush1.msra.mxu0 0.0
        %745 = vmatprep.subr.mxu0 0.0
        %746 = vmatpush1.msra.mxu0 0.0
        %747 = vmatprep.subr.mxu0 0.0
        %748 = vmatpush1.msra.mxu0 0.0
        %749 = vmatprep.subr.mxu0 0.0
        %750 = vmatpush1.msra.mxu0 0.0
        %751 = vmatprep.subr.mxu0 0.0
        %752 = vmatpush1.msra.mxu0 0.0
        %753 = vmatprep.subr.mxu0 0.0
        %754 = vmatpush1.msra.mxu0 0.0
        %755 = vmatprep.subr.mxu0 0.0
        %756 = vmatpush1.msra.mxu0 0.0
        %757 = vmatprep.mubr.f32.mxu0 0.0
        %758 = vmatmul.mubr.f32.gmra.mrb[0].mxu0 %v470
        %v759 = vpop.f32.mrb[0].mxu0
        %v760 = vadd.f32 0.0, %v759
        %v761 = vpop.f32.mrb[0].mxu0
        %762 = vdwg.mxu0
        %v763 = vmul.f32 %v760, 0.0625
        %v764 = vadd.f32 %v763, 1e-05
        %v765 = vrsqrt.pop %v764
        %v767 = vsel %vm568, %v765, 0
        %769 = vmatprep.subr.mxu0 0.0
        %770 = vmatpush1.msra.mxu0 %v767
        %771 = vmatprep.subr.mxu0 0.0
        %772 = vmatpush1.msra.mxu0 0.0
        %773 = vmatprep.subr.mxu0 0.0
        %774 = vmatpush1.msra.mxu0 0.0
        %775 = vmatprep.subr.mxu0 0.0
        %776 = vmatpush1.msra.mxu0 0.0
        %777 = vmatprep.subr.mxu0 0.0
        %778 = vmatpush1.msra.mxu0 0.0
        %779 = vmatprep.subr.mxu0 0.0
        %780 = vmatpush1.msra.mxu0 0.0
        %781 = vmatprep.subr.mxu0 0.0
        %782 = vmatpush1.msra.mxu0 0.0
        %783 = vmatprep.subr.mxu0 0.0
        %784 = vmatpush1.msra.mxu0 0.0
        %785 = vmatprep.subr.mxu0 0.0
        %786 = vmatpush1.msra.mxu0 0.0
        %787 = vmatprep.subr.mxu0 0.0
        %788 = vmatpush1.msra.mxu0 0.0
        %789 = vmatprep.subr.mxu0 0.0
        %790 = vmatpush1.msra.mxu0 0.0
        %791 = vmatprep.subr.mxu0 0.0
        %792 = vmatpush1.msra.mxu0 0.0
        %793 = vmatprep.subr.mxu0 0.0
        %794 = vmatpush1.msra.mxu0 0.0
        %795 = vmatprep.subr.mxu0 0.0
        %796 = vmatpush1.msra.mxu0 0.0
        %797 = vmatprep.subr.mxu0 0.0
        %798 = vmatpush1.msra.mxu0 0.0
        %799 = vmatprep.subr.mxu0 0.0
        %800 = vmatpush1.msra.mxu0 0.0
        %801 = vmatprep.subr.mxu0 0.0
        %802 = vmatpush1.msra.mxu0 0.0
        %803 = vmatprep.subr.mxu0 0.0
        %804 = vmatpush1.msra.mxu0 0.0
        %805 = vmatprep.subr.mxu0 0.0
        %806 = vmatpush1.msra.mxu0 0.0
        %807 = vmatprep.subr.mxu0 0.0
        %808 = vmatpush1.msra.mxu0 0.0
        %809 = vmatprep.subr.mxu0 0.0
        %810 = vmatpush1.msra.mxu0 0.0
        %811 = vmatprep.subr.mxu0 0.0
        %812 = vmatpush1.msra.mxu0 0.0
        %813 = vmatprep.subr.mxu0 0.0
        %814 = vmatpush1.msra.mxu0 0.0
        %815 = vmatprep.subr.mxu0 0.0
        %816 = vmatpush1.msra.mxu0 0.0
        %817 = vmatprep.subr.mxu0 0.0
        %818 = vmatpush1.msra.mxu0 0.0
        %819 = vmatprep.subr.mxu0 0.0
        %820 = vmatpush1.msra.mxu0 0.0
        %821 = vmatprep.subr.mxu0 0.0
        %822 = vmatpush1.msra.mxu0 0.0
        %823 = vmatprep.subr.mxu0 0.0
        %824 = vmatpush1.msra.mxu0 0.0
        %825 = vmatprep.subr.mxu0 0.0
        %826 = vmatpush1.msra.mxu0 0.0
        %827 = vmatprep.subr.mxu0 0.0
        %828 = vmatpush1.msra.mxu0 0.0
        %829 = vmatprep.subr.mxu0 0.0
        %830 = vmatpush1.msra.mxu0 0.0
        %831 = vmatprep.subr.mxu0 0.0
        %832 = vmatpush1.msra.mxu0 0.0
        %833 = vmatprep.mubr.f32.mxu0 0.0
        %834 = vmatmul.mubr.f32.gmra.mrb[0].mxu0 %v545
        %v835 = vpop.f32.mrb[0].mxu0
        %v836 = vadd.f32 0.0, %v835
        %v837 = vpop.f32.mrb[0].mxu0
        %838 = vmatprep.mubr.f32.mxu0 0.0
        %839 = vmatmul.mubr.f32.gmra.mrb[0].mxu0 %v548
        %v840 = vpop.f32.mrb[0].mxu0
        %v841 = vadd.f32 0.0, %v840
        %v842 = vpop.f32.mrb[0].mxu0
        %843 = vmatprep.mubr.f32.mxu0 0.0
        %844 = vmatmul.mubr.f32.gmra.mrb[0].mxu0 %v551
        %v845 = vpop.f32.mrb[0].mxu0
        %v846 = vadd.f32 0.0, %v845
        %v847 = vpop.f32.mrb[0].mxu0
        %848 = vmatprep.mubr.f32.mxu0 0.0
        %849 = vmatmul.mubr.f32.gmra.mrb[0].mxu0 %v554
        %v850 = vpop.f32.mrb[0].mxu0
        %v851 = vadd.f32 0.0, %v850
        %v852 = vpop.f32.mrb[0].mxu0
        %853 = vmatprep.mubr.f32.mxu0 0.0
        %854 = vmatmul.mubr.f32.gmra.mrb[0].mxu0 %v557
        %v855 = vpop.f32.mrb[0].mxu0
        %v856 = vadd.f32 0.0, %v855
        %v857 = vpop.f32.mrb[0].mxu0
        %858 = vmatprep.mubr.f32.mxu0 0.0
        %859 = vmatmul.mubr.f32.gmra.mrb[0].mxu0 %v560
        %v860 = vpop.f32.mrb[0].mxu0
        %v861 = vadd.f32 0.0, %v860
        %v862 = vpop.f32.mrb[0].mxu0
        %863 = vmatprep.mubr.f32.mxu0 0.0
        %864 = vmatmul.mubr.f32.gmra.mrb[0].mxu0 %v563
        %v865 = vpop.f32.mrb[0].mxu0
        %v866 = vadd.f32 0.0, %v865
        %v867 = vpop.f32.mrb[0].mxu0
        %868 = vmatprep.mubr.f32.mxu0 0.0
        %869 = vmatmul.mubr.f32.gmra.mrb[0].mxu0 %v566
        %v870 = vpop.f32.mrb[0].mxu0
        %v871 = vadd.f32 0.0, %v870
        %v872 = vpop.f32.mrb[0].mxu0
        %873 = vdwg.mxu0
        %v874 = vmul.f32 %v677, %v836
        %v875 = vmul.f32 %v678, %v841
        %v876 = vmul.f32 %v679, %v846
        %v877 = vmul.f32 %v680, %v851
        %v878 = vmul.f32 %v681, %v856
        %v879 = vmul.f32 %v682, %v861
        %v880 = vmul.f32 %v683, %v866
        %v881 = vmul.f32 %v684, %v871
        %v882 = vld [vmem:[%s4] sm:$0xff]
        %v883 = vld [vmem:[%s4 + $0x8] sm:$0xff]
        %v884 = vld [vmem:[%s4 + $0x10] sm:$0xff]
        %v885 = vld [vmem:[%s4 + $0x18] sm:$0xff]
        %v886 = vld [vmem:[%s4 + $0x20] sm:$0xff]
        %v887 = vld [vmem:[%s4 + $0x28] sm:$0xff]
        %v888 = vld [vmem:[%s4 + $0x30] sm:$0xff]
        %v889 = vld [vmem:[%s4 + $0x38] sm:$0xff]
        %891 = vset.pattern.permute.xlu0 0
        %892 = vperm.xlu0 %891, %v882
        %v893 = vpop.permute.xlu0 %892
        %896 = vset.pattern.permute.xlu0 0
        %897 = vperm.xlu0 %896, %v883
        %v898 = vpop.permute.xlu0 %897
        %901 = vset.pattern.permute.xlu0 0
        %902 = vperm.xlu0 %901, %v884
        %v903 = vpop.permute.xlu0 %902
        %906 = vset.pattern.permute.xlu0 0
        %907 = vperm.xlu0 %906, %v885
        %v908 = vpop.permute.xlu0 %907
        %911 = vset.pattern.permute.xlu0 0
        %912 = vperm.xlu0 %911, %v886
        %v913 = vpop.permute.xlu0 %912
        %916 = vset.pattern.permute.xlu0 0
        %917 = vperm.xlu0 %916, %v887
        %v918 = vpop.permute.xlu0 %917
        %921 = vset.pattern.permute.xlu0 0
        %922 = vperm.xlu0 %921, %v888
        %v923 = vpop.permute.xlu0 %922
        %926 = vset.pattern.permute.xlu0 0
        %927 = vperm.xlu0 %926, %v889
        %v928 = vpop.permute.xlu0 %927
        %v930 = vmul.f32 %v874, %v893
        %v931 = vmul.f32 %v875, %v898
        %v932 = vmul.f32 %v876, %v903
        %v933 = vmul.f32 %v877, %v908
        %v934 = vmul.f32 %v878, %v913
        %v935 = vmul.f32 %v879, %v918
        %v936 = vmul.f32 %v880, %v923
        %v937 = vmul.f32 %v881, %v928
        %v938 = vld [vmem:[%s5] sm:$0xff]
        %v939 = vld [vmem:[%s5 + $0x8] sm:$0xff]
        %v940 = vld [vmem:[%s5 + $0x10] sm:$0xff]
        %v941 = vld [vmem:[%s5 + $0x18] sm:$0xff]
        %v942 = vld [vmem:[%s5 + $0x20] sm:$0xff]
        %v943 = vld [vmem:[%s5 + $0x28] sm:$0xff]
        %v944 = vld [vmem:[%s5 + $0x30] sm:$0xff]
        %v945 = vld [vmem:[%s5 + $0x38] sm:$0xff]
        %947 = vset.pattern.permute.xlu0 0
        %948 = vperm.xlu0 %947, %v938
        %v949 = vpop.permute.xlu0 %948
        %952 = vset.pattern.permute.xlu0 0
        %953 = vperm.xlu0 %952, %v939
        %v954 = vpop.permute.xlu0 %953
        %957 = vset.pattern.permute.xlu0 0
        %958 = vperm.xlu0 %957, %v940
        %v959 = vpop.permute.xlu0 %958
        %962 = vset.pattern.permute.xlu0 0
        %963 = vperm.xlu0 %962, %v941
        %v964 = vpop.permute.xlu0 %963
        %967 = vset.pattern.permute.xlu0 0
        %968 = vperm.xlu0 %967, %v942
        %v969 = vpop.permute.xlu0 %968
        %972 = vset.pattern.permute.xlu0 0
        %973 = vperm.xlu0 %972, %v943
        %v974 = vpop.permute.xlu0 %973
        %977 = vset.pattern.permute.xlu0 0
        %978 = vperm.xlu0 %977, %v944
        %v979 = vpop.permute.xlu0 %978
        %982 = vset.pattern.permute.xlu0 0
        %983 = vperm.xlu0 %982, %v945
        %v984 = vpop.permute.xlu0 %983
        %v986 = vadd.f32 %v930, %v949
        %v987 = vadd.f32 %v931, %v954
        %v988 = vadd.f32 %v932, %v959
        %v989 = vadd.f32 %v933, %v964
        %v990 = vadd.f32 %v934, %v969
        %v991 = vadd.f32 %v935, %v974
        %v992 = vadd.f32 %v936, %v979
        %v993 = vadd.f32 %v937, %v984
        %994 = vst [vmem:[%s314] sm:$0xff] %v986
        %995 = vst [vmem:[%s314 + $0x8] sm:$0xff] %v987
        %996 = vst [vmem:[%s314 + $0x10] sm:$0xff] %v988
        %997 = vst [vmem:[%s314 + $0x18] sm:$0xff] %v989
        %998 = vst [vmem:[%s314 + $0x20] sm:$0xff] %v990
        %999 = vst [vmem:[%s314 + $0x28] sm:$0xff] %v991
        %1000 = vst [vmem:[%s314 + $0x30] sm:$0xff] %v992
        %1001 = vst [vmem:[%s314 + $0x38] sm:$0xff] %v993
        %s1002 = sand.u32 %s175, 1
        %s1003 = scalar_lea.sflag [#allocation4], %s1002
        %s1004 = sand.u32 %s175, 1
        %s1005 = smul.addr %s1004, 64
        %s1006 = scalar_lea.vmem [#allocation3], %s1005
        // Predicated region
        $region83: #{tpu_custom_call.1} parent=77 // pred_check
          %p1007 = pneg %p185
        $region84: #{tpu_custom_call.1} parent=77 // pred_check_branch
          %1009 = sbr.rel (%p1007) target = $region86
        $region85: #{tpu_custom_call.1} parent=77 // pred_region
          %s1010 = smul.u32 8, %s24
          %s1012 = ssub.s32 1024, 1024
          %1013 = vsyncadd %s1003, %s1012
          %s1014 = smul.addr %s1010, 2
          %s1015 = sadd.s32 %s25, %s1014
          %s1016 = smul.addr %s1015, 128
          %s1017 = scalar_lea.hbm %s6, %s1016
          %s1018 = sshll.u32 %s1006, 4
          %s1019 = int_to_ptr.vmem [resolvable:$true] %s1018
          %1024 = dma.vmem_to_hbm [thread:$0]  %s1019, 1024, %s1017, %s1003, 128, 256, 8
        $region86: #{tpu_custom_call.1} parent=77 // pred_fallthru
          _
      $region78: #{tpu_custom_call.1} parent=5 // pred_fallthru
        _
      %p1025 = scmp.le.s32.totalorder 2, %s15
      // Predicated region
      $region87: #{tpu_custom_call.1} parent=5 // pred_check
        %p1026 = pneg %p1025
      $region88: #{tpu_custom_call.1} parent=5 // pred_check_branch
        %1028 = sbr.rel (%p1026) target = $region90
      $region89: #{tpu_custom_call.1} parent=5 // pred_region
        %s1029 = ssub.s32 %s15, 2
        // Predicated region
        $region91: #{tpu_custom_call.1} parent=89 // pred_check
          %p1030 = pneg %p191
        $region92: #{tpu_custom_call.1} parent=89 // pred_check_branch
          %1032 = sbr.rel (%p1030) target = $region94
        $region93: #{tpu_custom_call.1} parent=89 // pred_region
          %s1033 = sand.u32 %s176, 1
          %s1034 = scalar_lea.sflag [#allocation4], %s1033
          %s1035 = sand.u32 %s176, 1
          %s1036 = smul.addr %s1035, 64
          %s1037 = scalar_lea.vmem [#allocation3], %s1036
          %1038 = dma.done %s1034, 1024
        $region94: #{tpu_custom_call.1} parent=89 // pred_fallthru
          _
      $region90: #{tpu_custom_call.1} parent=5 // pred_fallthru
        _
    $region6: #{tpu_custom_call.1} parent=1 // loop_footer
      %s19 = sadd.s32 1, %s15
    $region7: #{tpu_custom_call.1} parent=1 // loop_footer_branch
      %14 = sbr.rel target = $region3
    $region8: #{tpu_custom_call.1} parent=1 // loop_exit
      _
    %1039 = vsyncpa [#allocation4], 1
    %s1040 = scalar_lea.sflag [#allocation4], 1
    %1041 = vsyncpa %s1040, 1

</llo_original>
